<compile_context>
chip_gen: v7x
topology: tpu7x:2x2x1
jax: 0.10.0
libtpu: 0.0.40
codegen_flags: <defaults>
</compile_context>

<pallas_src>
import jax
import jax.numpy as jnp
from jax.experimental import pallas as pl
from jax.experimental.pallas import tpu as pltpu


def identity2d_kernel(x_ref, s_ref, o_ref):
    # x_ref: (1, TC, HW) slab of one sample's channels.
    # s_ref: (1, TC, 1) masked per-channel scale (broadcasts over HW lanes).
    o_ref[...] = (x_ref[...] * s_ref[...]).astype(o_ref.dtype)


def identity2d(x, weight, weight_mask, *, target_block_bytes=2 * 1024 * 1024):
    """x: (N, C, H, W); weight, weight_mask: (C, 1, 1)."""
    N, C, H, W = x.shape
    HW = H * W

    # Fold the mask into the weight once, outside the kernel. Shape (1, C, 1)
    # broadcasts against the (1, TC, HW) input block inside the kernel.
    scale = (weight_mask * weight).reshape(1, C, 1)

    # Lane-dense layout: collapse spatial dims so the last block dim is H*W.
    x3 = x.reshape(N, C, HW)

    # Pick the channel tile TC: a divisor of C that is either C itself or a
    # multiple of 8 (TPU sublane rule), the largest one whose (TC, HW) slab
    # stays under the target block size.
    itemsize = jnp.dtype(x.dtype).itemsize
    valid = [d for d in range(1, C + 1) if C % d == 0 and (d == C or d % 8 == 0)]
    fitting = [d for d in valid if d * HW * itemsize <= target_block_bytes]
    tc = max(fitting) if fitting else min(valid)
    # TODO(synk): if a single channel slab (HW * itemsize) ever exceeds the
    # VMEM budget, additionally tile HW in multiples of 128.

    grid = (N, C // tc)

    out3 = pl.pallas_call(
        identity2d_kernel,
        out_shape=jax.ShapeDtypeStruct((N, C, HW), x.dtype),
        grid_spec=pl.GridSpec(
            grid=grid,
            in_specs=[
                pl.BlockSpec((1, tc, HW), lambda n, c: (n, c, 0)),
                pl.BlockSpec((1, tc, 1), lambda n, c: (0, c, 0)),
            ],
            out_specs=pl.BlockSpec((1, tc, HW), lambda n, c: (n, c, 0)),
        ),
        compiler_params=pltpu.CompilerParams(
            dimension_semantics=("parallel", "parallel"),
        ),
    )(x3, scale)

    return out3.reshape(N, C, H, W)


if __name__ == "__main__":
    key = jax.random.PRNGKey(0)
    N, C, H, W = 2, 4, 16, 16

    kx, kw, km = jax.random.split(key, 3)
    x = jax.random.normal(kx, (N, C, H, W), dtype=jnp.float32)

    # Deterministic parameter init matching reset_parameters (init.ones_) and
    # the registered all-ones weight_mask buffer.
    weight = jnp.ones((C, 1, 1), dtype=jnp.float32)
    weight_mask = jnp.ones((C, 1, 1), dtype=jnp.float32)

    out = identity2d(x, weight, weight_mask)
    out = jax.block_until_ready(out)

    ref = x * (weight_mask * weight)  # broadcast (C,1,1) over (N,C,H,W)
    assert out.shape == x.shape and out.dtype == x.dtype
    assert jnp.allclose(out, ref), "mismatch vs reference (ones weights)"

    # Extra sanity check with non-trivial per-channel weights / mask to
    # exercise the broadcast path.
    weight2 = jax.random.normal(kw, (C, 1, 1), dtype=jnp.float32)
    mask2 = (jax.random.uniform(km, (C, 1, 1)) > 0.5).astype(jnp.float32)
    out2 = jax.block_until_ready(identity2d(x, weight2, mask2))
    ref2 = x * (mask2 * weight2)
    assert jnp.allclose(out2, ref2, atol=1e-6), "mismatch vs reference (random weights)"

    print("KERNEL_OK")
</pallas_src>

<mosaic_0001>
module attributes {stable_mosaic.version = 11 : i64} {
  func.func @identity2d_kernel(%arg0: i32, %arg1: i32, %arg2: memref<1x4x256xf32, #tpu.memory_space<vmem>>, %arg3: memref<1x4x1xf32, #tpu.memory_space<vmem>>, %arg4: memref<1x4x256xf32, #tpu.memory_space<vmem>>) attributes {dimension_semantics = [#tpu.dimension_semantics<parallel>, #tpu.dimension_semantics<parallel>], iteration_bounds = array<i64: 2, 1>, scalar_prefetch = 0 : i64, scratch_operands = 0 : i64, tpu.core_type = #tpu.core_type<tc>, window_params = [{transform_indices = @transform_0, window_bounds = array<i64: 1, 4, 256>}, {transform_indices = @transform_1, window_bounds = array<i64: 1, 4, 1>}, {transform_indices = @transform_2, window_bounds = array<i64: 1, 4, 256>}]} {
    %c0 = arith.constant 0 : index
    %c0_0 = arith.constant 0 : index
    %c0_1 = arith.constant 0 : index
    %0 = vector.load %arg2[%c0, %c0_0, %c0_1] : memref<1x4x256xf32, #tpu.memory_space<vmem>>, vector<1x4x256xf32>
    %c0_2 = arith.constant 0 : index
    %c0_3 = arith.constant 0 : index
    %c0_4 = arith.constant 0 : index
    %1 = vector.load %arg3[%c0_2, %c0_3, %c0_4] : memref<1x4x1xf32, #tpu.memory_space<vmem>>, vector<1x4x1xf32>
    %2 = vector.broadcast %1 : vector<1x4x1xf32> to vector<1x4x256xf32>
    %3 = arith.mulf %0, %2 : vector<1x4x256xf32>
    %c0_5 = arith.constant 0 : index
    %c0_6 = arith.constant 0 : index
    %c0_7 = arith.constant 0 : index
    %4 = vector.load %arg4[%c0_5, %c0_6, %c0_7] : memref<1x4x256xf32, #tpu.memory_space<vmem>>, vector<1x4x256xf32>
    tpu.vector_store %arg4[%c0_5, %c0_6, %c0_7], %3 {strides = array<i32>} : memref<1x4x256xf32, #tpu.memory_space<vmem>>, vector<1x4x256xf32>,
    return
  }
  func.func @transform_0(%arg0: i32, %arg1: i32) -> (i32, i32, i32) {
    %c0_i32 = arith.constant 0 : i32
    %c0_i32_0 = arith.constant 0 : i32
    return %arg0, %arg1, %c0_i32 : i32, i32, i32
  }
  func.func @transform_1(%arg0: i32, %arg1: i32) -> (i32, i32, i32) {
    %c0_i32 = arith.constant 0 : i32
    %c0_i32_0 = arith.constant 0 : i32
    %c0_i32_1 = arith.constant 0 : i32
    return %c0_i32, %arg1, %c0_i32_0 : i32, i32, i32
  }
  func.func @transform_2(%arg0: i32, %arg1: i32) -> (i32, i32, i32) {
    %c0_i32 = arith.constant 0 : i32
    %c0_i32_0 = arith.constant 0 : i32
    return %arg0, %arg1, %c0_i32 : i32, i32, i32
  }
}

</mosaic_0001>

<llo_original>
// kernel: tpu_custom_call.1
$region0: #{tpu_custom_call.1}
  #allocation0 [shape = 'u32[]', space=smem, size = 0x4, offset = 0x4, fixed_abs, tag = 'smem constant byte address 0x4 - core index']
  #allocation1 [shape = 'u32[144,128]{1,0:T(1,128)}', space=vmem, size = 0x12000, scoped, tag = 'internal scratch']
  %s0 = inlined_call_operand.hbm [shape: f32[2,4,256], index: 0, kind: input, shape index: {}]
  %s1 = inlined_call_operand.vmem [shape: f32[1,4,1], index: 1, kind: input, shape index: {}]
  %s2 = inlined_call_operand.hbm [shape: f32[2,4,256], index: 2, kind: output, shape index: {}]
  %s3 = sld [smem:[#allocation0]]
  $region45: #{tpu_custom_call.1} parent=0
    _
  %s5 = ssub.s32 1, %s3
  %s6 = scalar_select 0, %s5, %s3
  $region1: #{tpu_custom_call.1} parent=0
    #allocation2 [shape = 'u8[8192]{0}', space=vmem, size = 0x2000, scoped, tag = 'input window, operand 0']
    #allocation3 [shape = 's32[2]{0}', space=sflag, size = 0x8, scoped, tag = 'scoped memory for tpu_custom_call.1']
    #allocation4 [shape = 's32[2]{0}', space=sflag, size = 0x8, scoped, tag = 'scoped memory for tpu_custom_call.1']
    #allocation5 [shape = 'u8[8192]{0}', space=vmem, size = 0x2000, scoped, tag = 'output window, operand 0']
    %7 = vsyncpa [#allocation3], 0
    %s8 = scalar_lea.sflag [#allocation3], 1
    %9 = vsyncpa %s8, 0
    %10 = vsyncpa [#allocation4], 0
    %s11 = scalar_lea.sflag [#allocation4], 1
    %12 = vsyncpa %s11, 0
    loop: start=0, step=1, limit=4
    $region2: #{tpu_custom_call.1} parent=1 // loop_pre_header
      _
    $region3: #{tpu_custom_call.1} parent=1 // loop_header
      %s14 = sphi 0, %s18
      %p15 = scmp.ge.s32.totalorder %s14, 4
      %s21 = sphi 0, %s33
      %s22 = sphi 0, %s29
      %s23 = sphi 0, %s21
      %s24 = sphi 0, %s22
      %s25 = sphi 0, %s23
      %s26 = sphi 0, %s24
      %s38 = sphi 0, %s40
      %s41 = sphi 0, %s38
      %s42 = sphi 0, %s41
      %s58 = sphi 0, %s42
      %s64 = sphi 0, %s66
      %s67 = sphi 0, %s64
      %s68 = sphi 0, %s67
      %s84 = sphi 0, %s68
      %s92 = sphi 0, %s94
      %s95 = sphi 0, %s92
      %s96 = sphi 0, %s95
      %s112 = sphi 0, %s96
    $region4: #{tpu_custom_call.1} parent=1 // loop_header_branch
      %17 = sbr.rel (%p15) target = $region8
    $region5: #{tpu_custom_call.1} parent=1 // loop_body
      %s19 = ssub.s32 %s14, 1
      %s20 = ssub.s32 %s14, 2
      %s27 = sadd.s32 1, %s22
      %p28 = scmp.ge.s32.totalorder %s27, 1
      %s29 = scalar_select %p28, 0, %s27
      %s30 = sadd.s32 1, %s21
      %s31 = scalar_select %p28, %s30, %s21
      %p32 = scmp.ge.s32.totalorder %s31, 2
      %s33 = scalar_select %p32, 0, %s31
      %s34 = ssub.s32 %s21, %s33
      %s35 = ssub.s32 %s22, %s29
      %s36 = sor.u32 %s34, %s35
      %p37 = scmp.eq.s32.totalorder %s36, 0
      %s39 = sadd.s32 %s38, 1
      %s40 = scalar_select %p37, %s38, %s39
      %p43 = pneg %p37
      %p44 = scmp.eq.s32.totalorder %s14, 1
      %p45 = por %p43, %p44
      %p46 = scmp.ne.s32.totalorder %s38, %s41
      %p47 = scmp.eq.s32.totalorder %s14, 0
      %p48 = por %p46, %p47
      %p49 = scmp.ne.s32.totalorder %s38, %s41
      %p50 = scmp.eq.s32.totalorder %s19, 1
      %p51 = por %p49, %p50
      %p52 = scmp.ne.s32.totalorder %s41, %s42
      %p53 = scmp.eq.s32.totalorder %s19, 0
      %p54 = por %p52, %p53
      %p55 = scmp.ne.s32.totalorder %s41, %s42
      %p56 = scmp.eq.s32.totalorder %s20, 1
      %p57 = por %p55, %p56
      %p59 = scmp.ne.s32.totalorder %s42, %s58
      %p60 = scmp.eq.s32.totalorder %s20, 0
      %p61 = por %p59, %p60
      %s62 = ssub.s32 %s22, %s29
      %p63 = scmp.eq.s32.totalorder %s62, 0
      %s65 = sadd.s32 %s64, 1
      %s66 = scalar_select %p63, %s64, %s65
      %p69 = pneg %p63
      %p70 = scmp.eq.s32.totalorder %s14, 1
      %p71 = por %p69, %p70
      %p72 = scmp.ne.s32.totalorder %s64, %s67
      %p73 = scmp.eq.s32.totalorder %s14, 0
      %p74 = por %p72, %p73
      %p75 = scmp.ne.s32.totalorder %s64, %s67
      %p76 = scmp.eq.s32.totalorder %s19, 1
      %p77 = por %p75, %p76
      %p78 = scmp.ne.s32.totalorder %s67, %s68
      %p79 = scmp.eq.s32.totalorder %s19, 0
      %p80 = por %p78, %p79
      %p81 = scmp.ne.s32.totalorder %s67, %s68
      %p82 = scmp.eq.s32.totalorder %s20, 1
      %p83 = por %p81, %p82
      %p85 = scmp.ne.s32.totalorder %s68, %s84
      %p86 = scmp.eq.s32.totalorder %s20, 0
      %p87 = por %p85, %p86
      %s88 = ssub.s32 %s21, %s33
      %s89 = ssub.s32 %s22, %s29
      %s90 = sor.u32 %s88, %s89
      %p91 = scmp.eq.s32.totalorder %s90, 0
      %s93 = sadd.s32 %s92, 1
      %s94 = scalar_select %p91, %s92, %s93
      %p97 = pneg %p91
      %p98 = scmp.eq.s32.totalorder %s14, 1
      %p99 = por %p97, %p98
      %p100 = scmp.ne.s32.totalorder %s92, %s95
      %p101 = scmp.eq.s32.totalorder %s14, 0
      %p102 = por %p100, %p101
      %p103 = scmp.ne.s32.totalorder %s92, %s95
      %p104 = scmp.eq.s32.totalorder %s19, 1
      %p105 = por %p103, %p104
      %p106 = scmp.ne.s32.totalorder %s95, %s96
      %p107 = scmp.eq.s32.totalorder %s19, 0
      %p108 = por %p106, %p107
      %p109 = scmp.ne.s32.totalorder %s95, %s96
      %p110 = scmp.eq.s32.totalorder %s20, 1
      %p111 = por %p109, %p110
      %p113 = scmp.ne.s32.totalorder %s96, %s112
      %p114 = scmp.eq.s32.totalorder %s20, 0
      %p115 = por %p113, %p114
      %p116 = scmp.le.s32.totalorder 1, %s14
      %p117 = scmp.lt.s32.totalorder %s14, 3
      %p118 = pnand %p116, %p117
      %p119 = pneg %p118
      // Predicated region
      $region9: #{tpu_custom_call.1} parent=5 // pred_check
        _
      $region10: #{tpu_custom_call.1} parent=5 // pred_check_branch
        %121 = sbr.rel (%p118) target = $region12
      $region11: #{tpu_custom_call.1} parent=5 // pred_region
        %s122 = ssub.s32 %s14, 1
        // Predicated region
        $region13: #{tpu_custom_call.1} parent=11 // pred_check
          %p123 = pneg %p80
        $region14: #{tpu_custom_call.1} parent=11 // pred_check_branch
          %125 = sbr.rel (%p123) target = $region16
        $region15: #{tpu_custom_call.1} parent=11 // pred_region
          %p126 = scmp.lt.s32.totalorder %s24, 0
          %s127 = scalar_select %p126, %s24, 0
          %s128 = smul.addr %s127, 4
          %s129 = scalar_lea.vmem %s1, %s128
        $region16: #{tpu_custom_call.1} parent=11 // pred_fallthru
          _
      $region12: #{tpu_custom_call.1} parent=5 // pred_fallthru
        _
      %p130 = scmp.lt.s32.totalorder %s14, 2
      // Predicated region
      $region17: #{tpu_custom_call.1} parent=5 // pred_check
        %p131 = pneg %p130
      $region18: #{tpu_custom_call.1} parent=5 // pred_check_branch
        %133 = sbr.rel (%p131) target = $region20
      $region19: #{tpu_custom_call.1} parent=5 // pred_region
        // Predicated region
        $region21: #{tpu_custom_call.1} parent=19 // pred_check
          %p134 = pneg %p48
        $region22: #{tpu_custom_call.1} parent=19 // pred_check_branch
          %136 = sbr.rel (%p134) target = $region24
        $region23: #{tpu_custom_call.1} parent=19 // pred_region
          %s137 = sand.u32 %s38, 1
          %s138 = scalar_lea.sflag [#allocation3], %s137
          %s139 = sand.u32 %s38, 1
          %s140 = smul.addr %s139, 8
          %s141 = scalar_lea.vmem [#allocation2], %s140
          %s143 = ssub.s32 128, 128
          %144 = vsyncadd %s138, %s143
          %s145 = smul.addr %s22, 2
          %s146 = smul.addr %s21, 2
          %s147 = sadd.s32 %s145, %s146
          %s148 = smul.addr %s147, 64
          %s149 = scalar_lea.hbm %s0, %s148
          %s151 = sshll.u32 %s141, 4
          %s152 = int_to_ptr.vmem [resolvable:$true] %s151
          %154 = dma.hbm_to_vmem [thread:$0]  %s149, 128, %s152, %s138
        $region24: #{tpu_custom_call.1} parent=19 // pred_fallthru
          _
      $region20: #{tpu_custom_call.1} parent=5 // pred_fallthru
        _
      %p155 = scmp.le.s32.totalorder 1, %s14
      %p156 = scmp.lt.s32.totalorder %s14, 3
      %p157 = pnand %p155, %p156
      %p158 = pneg %p157
      // Predicated region
      $region25: #{tpu_custom_call.1} parent=5 // pred_check
        _
      $region26: #{tpu_custom_call.1} parent=5 // pred_check_branch
        %160 = sbr.rel (%p157) target = $region28
      $region27: #{tpu_custom_call.1} parent=5 // pred_region
        %s161 = ssub.s32 %s14, 1
        %s162 = sand.u32 %s41, 1
        %s163 = scalar_lea.sflag [#allocation3], %s162
        %s164 = sand.u32 %s41, 1
        %s165 = smul.addr %s164, 8
        %s166 = scalar_lea.vmem [#allocation2], %s165
        // Predicated region
        $region29: #{tpu_custom_call.1} parent=27 // pred_check
          %p167 = pneg %p54
        $region30: #{tpu_custom_call.1} parent=27 // pred_check_branch
          %169 = sbr.rel (%p167) target = $region32
        $region31: #{tpu_custom_call.1} parent=27 // pred_region
          %170 = dma.done %s163, 128
        $region32: #{tpu_custom_call.1} parent=27 // pred_fallthru
          _
        %s171 = sand.u32 %s41, 1
        %s172 = scalar_lea.sflag [#allocation3], %s171
        %s173 = sand.u32 %s41, 1
        %s174 = smul.addr %s173, 8
        %s175 = scalar_lea.vmem [#allocation2], %s174
        %p176 = pneg %p54
        %p177 = pneg %p51
        %p178 = scmp.lt.s32.totalorder %s24, 0
        %s179 = scalar_select %p178, %s24, 0
        %s180 = smul.addr %s179, 4
        %s181 = scalar_lea.vmem %s1, %s180
        %p182 = pneg %p80
        %p183 = pneg %p77
        %p184 = pneg %p108
        %p185 = pneg %p105
        %s186 = sand.u32 %s95, 1
        %s187 = scalar_lea.sflag [#allocation4], %s186
        %s188 = sand.u32 %s95, 1
        %s189 = smul.addr %s188, 8
        %s190 = scalar_lea.vmem [#allocation5], %s189
        %p191 = scmp.lt.s32.totalorder %s24, 0
        %s192 = scalar_select %p191, %s24, 0
        %s193 = smul.addr %s192, 4
        %s194 = scalar_lea.vmem %s1, %s193
        %v195 = vld [vmem:[%s166] sm:$0xff]
        %v196 = vld [vmem:[%s194] sm:$0xf]
        %198 = vset.pattern.permute.xlu0 0
        %199 = vperm.xlu0 %198, %v196
        %v200 = vpop.permute.xlu0 %199
        %v202 = vunpack.c.l.s4 839922192
        %v203 = vunpack.c.0.s8 %v202
        %v204 = vlaneseq
        %v205 = vshrl.u32 %v204, 7
        %v206 = vsub.s32 %v203, %v205
        %v207 = vrot.slane %v200, %v206
        %v209 = vmul.f32 %v195, %v207
        %210 = vst [vmem:[%s190] sm:$0xff] %v209
        %s211 = sand.u32 %s95, 1
        %s212 = scalar_lea.sflag [#allocation4], %s211
        %s213 = sand.u32 %s95, 1
        %s214 = smul.addr %s213, 8
        %s215 = scalar_lea.vmem [#allocation5], %s214
        // Predicated region
        $region33: #{tpu_custom_call.1} parent=27 // pred_check
          %p216 = pneg %p105
        $region34: #{tpu_custom_call.1} parent=27 // pred_check_branch
          %218 = sbr.rel (%p216) target = $region36
        $region35: #{tpu_custom_call.1} parent=27 // pred_region
          %s220 = ssub.s32 128, 128
          %221 = vsyncadd %s212, %s220
          %s222 = smul.addr %s24, 2
          %s223 = smul.addr %s23, 2
          %s224 = sadd.s32 %s222, %s223
          %s225 = smul.addr %s224, 64
          %s226 = scalar_lea.hbm %s2, %s225
          %s228 = sshll.u32 %s215, 4
          %s229 = int_to_ptr.vmem [resolvable:$true] %s228
          %231 = dma.vmem_to_hbm [thread:$0]  %s229, 128, %s226, %s212
        $region36: #{tpu_custom_call.1} parent=27 // pred_fallthru
          _
      $region28: #{tpu_custom_call.1} parent=5 // pred_fallthru
        _
      %p232 = scmp.le.s32.totalorder 2, %s14
      // Predicated region
      $region37: #{tpu_custom_call.1} parent=5 // pred_check
        %p233 = pneg %p232
      $region38: #{tpu_custom_call.1} parent=5 // pred_check_branch
        %235 = sbr.rel (%p233) target = $region40
      $region39: #{tpu_custom_call.1} parent=5 // pred_region
        %s236 = ssub.s32 %s14, 2
        // Predicated region
        $region41: #{tpu_custom_call.1} parent=39 // pred_check
          %p237 = pneg %p111
        $region42: #{tpu_custom_call.1} parent=39 // pred_check_branch
          %239 = sbr.rel (%p237) target = $region44
        $region43: #{tpu_custom_call.1} parent=39 // pred_region
          %s240 = sand.u32 %s96, 1
          %s241 = scalar_lea.sflag [#allocation4], %s240
          %s242 = sand.u32 %s96, 1
          %s243 = smul.addr %s242, 8
          %s244 = scalar_lea.vmem [#allocation5], %s243
          %245 = dma.done %s241, 128
        $region44: #{tpu_custom_call.1} parent=39 // pred_fallthru
          _
      $region40: #{tpu_custom_call.1} parent=5 // pred_fallthru
        _
    $region6: #{tpu_custom_call.1} parent=1 // loop_footer
      %s18 = sadd.s32 1, %s14
    $region7: #{tpu_custom_call.1} parent=1 // loop_footer_branch
      %13 = sbr.rel target = $region3
    $region8: #{tpu_custom_call.1} parent=1 // loop_exit
      _
    %246 = vsyncpa [#allocation3], 1
    %s247 = scalar_lea.sflag [#allocation3], 1
    %248 = vsyncpa %s247, 1
    %249 = vsyncpa [#allocation4], 1
    %s250 = scalar_lea.sflag [#allocation4], 1
    %251 = vsyncpa %s250, 1

</llo_original>
